<compile_context>
chip_gen: v5e
topology: v5e:2x2
jax: 0.10.0
libtpu: 0.0.40
codegen_flags: <defaults>
</compile_context>

<pallas_src>
import math
import numpy as np
import jax
import jax.numpy as jnp
from jax.experimental import pallas as pl
from jax.experimental.pallas import tpu as pltpu

LATENT = 32          # self.latent_dim
INPUT_FEATS = 203    # self.input_feats
EXAMPLE_FEATS = 100  # fc2 in-features
NFRAMES = 15         # x / x_t sequence length
PAST_LEN = 15        # past_motion sequence length
CAT_DIM = PAST_LEN + 1 + 1 + 2 * NFRAMES   # 47 == self.cat_dim
SEQ_PAD = 48         # 47 real seq rows + 1 zero pad row (multiple of 16 for bf16)
K_PAD = 256          # contraction dim: 203 padded to 256
OUT_DIM = 10         # final_fc out-features
OUT_PAD = 128        # lane-dense output width (sliced to 10 in the wrapper)
MLP_H1, MLP_H2 = 256, 128
MAX_LEN = 1000       # positional-encoding table length (t < MAX_LEN assumed)

# ---- packed-parameter row layouts (all offsets tile aligned) ----------------
# wemb  [K_PAD, 128] bf16 : lanes 0:32 poseEmbedding | 32:64 fc1 | 64:96 fc2 | 96:128 time_embed[0]
# pmlp  [320, 256] bf16   : rows 0:32 w1 | 32:64 wt2 (lanes 0:32) | 64:320 w2 (lanes 0:128)
_ROW_W1, _ROW_WT2, _ROW_W2 = 0, 32, 64
PMLP_ROWS = 320
# pconst [136, 256] f32   : per-seq constants + all biases + final_fc weights
#   rows 0:48  lanes 0:128  group one-hot lane mask (per seq position)
#   rows 0:48  lanes 128:160 per-seq embedding bias row, lanes 160:192 emb-row flag
_ROW_B1, _ROW_B2, _ROW_BT2, _ROW_W3, _ROW_BF, _ROW_WF = 48, 56, 64, 72, 80, 88
PCONST_ROWS = 136


# ------------------------------ Pallas kernel --------------------------------

def gan_disc_fused_kernel(a_ref, wemb_ref, pmlp_ref, pconst_ref, o_ref):
  """Whole GANDiscriminator forward, single launch, everything VMEM resident."""
  bs = o_ref.shape[0]

  def mm(lhs, rhs):
    return jnp.dot(lhs, rhs, preferred_element_type=jnp.float32)

  def lrelu(v):                      # LeakyReLU(0.2): mul + max (2 VALU ops)
    return jnp.maximum(v, 0.2 * v)

  # ---- static (zero-cost) views into the packed parameter buffers ----
  w1 = pmlp_ref[_ROW_W1:_ROW_W1 + LATENT, :]                # [32, 256] bf16
  wt2 = pmlp_ref[_ROW_WT2:_ROW_WT2 + LATENT, 0:LATENT]      # [32, 32]  bf16
  w2 = pmlp_ref[_ROW_W2:_ROW_W2 + MLP_H1, 0:MLP_H2]         # [256,128] bf16

  gmask = pconst_ref[0:SEQ_PAD, 0:128]                      # [48,128] f32
  seq_hi = pconst_ref[0:SEQ_PAD, 128:256]                   # [48,128] f32
  brow = seq_hi[:, 0:LATENT]                                # per-seq embed bias
  embflag = seq_hi[:, LATENT:2 * LATENT]                    # 1.0 on the emb row
  b1 = pconst_ref[_ROW_B1:_ROW_B1 + 1, :]                   # [1,256] f32
  b2 = pconst_ref[_ROW_B2:_ROW_B2 + 1, 0:MLP_H2]            # [1,128]
  bt2 = pconst_ref[_ROW_BT2:_ROW_BT2 + 1, 0:LATENT]         # [1,32]
  w3row = pconst_ref[_ROW_W3:_ROW_W3 + 1, 0:MLP_H2]         # [1,128]
  bf = pconst_ref[_ROW_BF:_ROW_BF + 1, 0:OUT_PAD]           # [1,128] (b3 folded in)
  wf48 = pconst_ref[_ROW_WF:_ROW_WF + SEQ_PAD, 0:OUT_PAD]   # [48,128] (pad row = 0)

  # ---- one lane-packed embedding matmul: poseEmbedding | fc1 | fc2 | time_embed[0]
  e = mm(a_ref[...], wemb_ref[...])                          # [bs*48, 128] f32
  e3 = e.reshape(bs, SEQ_PAD, 128) * gmask                   # per-seq group select
  a0 = (e3[:, :, 0:32] + e3[:, :, 32:64] +
        e3[:, :, 64:96] + e3[:, :, 96:128]) + brow           # [bs, 48, 32] f32

  # ---- TimestepEmbedder second half (SiLU -> Linear).  Applied to every row
  #      (tiny: 1/8 of the first MLP matmul) and kept only on the s==16 row.
  t1 = a0 * jax.nn.sigmoid(a0)                               # SiLU in f32
  a1 = (mm(t1.reshape(-1, LATENT).astype(jnp.bfloat16), wt2) + bt2
        ).reshape(bs, SEQ_PAD, LATENT)
  xseq = (a0 + (a1 - a0) * embflag).reshape(-1, LATENT)      # [bs*48, 32] f32

  # ---- shared 32 -> 256 -> 128 LeakyReLU MLP over every (batch, seq) row ----
  h1 = lrelu(mm(xseq.astype(jnp.bfloat16), w1) + b1)         # [bs*48, 256] f32
  h2 = lrelu(mm(h1.astype(jnp.bfloat16), w2) + b2)           # [bs*48, 128] f32

  # ---- layers[-1] (128 -> 1, bias folded into bf_eff) + final_fc (47 -> 10) ----
  h3 = jnp.sum(h2.reshape(bs, SEQ_PAD, MLP_H2) * w3row, axis=-1)   # [bs, 48] f32
  o_ref[...] = mm(h3, wf48) + bf                             # [bs, 128] f32


# ---------------------------------- wrapper -----------------------------------

def gan_discriminator_forward(params, x, t, x_t, y):
  bs = x.shape[0]

  # Batch-major [bs, seq, feat] views of every segment (joint dim squeezed).
  x_b = x[:, :, 0, :].transpose(0, 2, 1)                     # [bs, 15, 203]
  xt_b = x_t[:, :, 0, :].transpose(0, 2, 1)                  # [bs, 15, 203]
  c1_b = y['past_motion'][:, :, 0, :].transpose(0, 2, 1)     # [bs, 15, 203]
  c2_b = y['example_motoin'][:, :, 0]                        # [bs, 100]
  pe_t = params['pe_table'][t]                               # [bs, 32]  (t < MAX_LEN assumed)

  # Row-stack, batch-major, 48 padded seq rows per batch, K padded to 256.
  # Seq order matches torch.cat((c1, c2, emb, x, x_t)):  0:15 c1 | 15 c2 | 16 emb(pe)
  # | 17:32 x | 32:47 x_t | 47 zero pad.
  a = jnp.zeros((bs, SEQ_PAD, K_PAD), jnp.float32)
  a = a.at[:, 0:PAST_LEN, 0:INPUT_FEATS].set(c1_b)
  a = a.at[:, PAST_LEN, 0:EXAMPLE_FEATS].set(c2_b)
  a = a.at[:, PAST_LEN + 1, 0:LATENT].set(pe_t)
  a = a.at[:, PAST_LEN + 2:PAST_LEN + 2 + NFRAMES, 0:INPUT_FEATS].set(x_b)
  a = a.at[:, PAST_LEN + 2 + NFRAMES:CAT_DIM, 0:INPUT_FEATS].set(xt_b)
  a = a.reshape(bs * SEQ_PAD, K_PAD).astype(jnp.bfloat16)

  vmem = pl.BlockSpec(memory_space=pltpu.MemorySpace.VMEM)
  out = pl.pallas_call(
      gan_disc_fused_kernel,
      out_shape=jax.ShapeDtypeStruct((bs, OUT_PAD), jnp.float32),
      in_specs=[vmem] * 4,
      out_specs=vmem,
      compiler_params=pltpu.CompilerParams(
          vmem_limit_bytes=32 * 1024 * 1024),
  )(a, params['wemb'], params['pmlp'], params['pconst'])
  return out[:, :OUT_DIM]


# ------------------------- deterministic params / packing --------------------

def build_pe_table(d_model=LATENT, max_len=MAX_LEN):
  position = np.arange(max_len, dtype=np.float32)[:, None]
  div_term = np.exp(np.arange(0, d_model, 2, dtype=np.float32) *
                    (-math.log(10000.0) / d_model))
  pe = np.zeros((max_len, d_model), dtype=np.float32)
  pe[:, 0::2] = np.sin(position * div_term)
  pe[:, 1::2] = np.cos(position * div_term)
  return jnp.asarray(pe)


def init_linear(key, fan_in, fan_out):
  # nn.Linear default-style init (synthetic weights). W stored [in, out].
  kw, kb = jax.random.split(key)
  bound = 1.0 / math.sqrt(fan_in)
  w = jax.random.uniform(kw, (fan_in, fan_out), jnp.float32, -bound, bound)
  b = jax.random.uniform(kb, (1, fan_out), jnp.float32, -bound, bound)
  return w, b


def init_dense(key, fan_in, fan_out, scale=1.0):
  # dense(): variance_scaling (fan_avg) uniform weight, zero bias.
  fan = max(1.0, (fan_in + fan_out) / 2.0)
  bound = math.sqrt(3.0 * scale / fan)
  w = jax.random.uniform(key, (fan_in, fan_out), jnp.float32, -bound, bound)
  b = jnp.zeros((1, fan_out), jnp.float32)
  return w, b


def pack_params(raw):
  """Pack all weights/biases into 3 contiguous, batch-size-independent buffers."""
  f = lambda v: np.asarray(v, np.float32)

  # Lane-packed embedding weights, contraction dim padded to 256.
  wemb = np.zeros((K_PAD, 4 * LATENT), np.float32)
  wemb[:INPUT_FEATS, 0:32] = f(raw['wpose'])
  wemb[:INPUT_FEATS, 32:64] = f(raw['wfc1'])
  wemb[:EXAMPLE_FEATS, 64:96] = f(raw['wfc2'])
  wemb[:LATENT, 96:128] = f(raw['wt1'])

  # Packed MLP weights (bf16).
  pmlp = np.zeros((PMLP_ROWS, MLP_H1), np.float32)
  pmlp[_ROW_W1:_ROW_W1 + LATENT, :] = f(raw['w1'])
  pmlp[_ROW_WT2:_ROW_WT2 + LATENT, :LATENT] = f(raw['wt2'])
  pmlp[_ROW_W2:_ROW_W2 + MLP_H1, :MLP_H2] = f(raw['w2'])

  # Per-seq-position constants + all biases + final_fc weights (f32).
  pconst = np.zeros((PCONST_ROWS, MLP_H1), np.float32)
  group_bias = [f(raw['bpose'])[0], f(raw['bfc1'])[0],
                f(raw['bfc2'])[0], f(raw['bt1'])[0]]
  for s in range(CAT_DIM):                      # row 47 stays all-zero (padding)
    if s < PAST_LEN:
      g = 1                                     # c1 -> fc1
    elif s == PAST_LEN:
      g = 2                                     # c2 -> fc2
    elif s == PAST_LEN + 1:
      g = 3                                     # emb -> time_embed[0]
    else:
      g = 0                                     # x / x_t -> poseEmbedding
    pconst[s, 32 * g:32 * (g + 1)] = 1.0        # group one-hot lane mask
    pconst[s, 128:160] = group_bias[g]          # per-seq embedding bias row
  pconst[PAST_LEN + 1, 160:192] = 1.0           # emb-row flag

  pconst[_ROW_B1, :] = f(raw['b1'])[0]
  pconst[_ROW_B2, :MLP_H2] = f(raw['b2'])[0]
  pconst[_ROW_BT2, :LATENT] = f(raw['bt2'])[0]
  pconst[_ROW_W3, :MLP_H2] = f(raw['w3'])[:, 0]
  # layers[-1] bias (b3) folds into the final_fc bias:
  #   sum_s (h2@w3 + b3)*wf[s] + bf == sum_s (h2@w3)*wf[s] + (bf + b3*sum_s wf[s])
  bf_eff = f(raw['bf'])[0] + float(f(raw['b3'])[0, 0]) * f(raw['wf']).sum(axis=0)
  pconst[_ROW_BF, :OUT_DIM] = bf_eff
  pconst[_ROW_WF:_ROW_WF + CAT_DIM, :OUT_DIM] = f(raw['wf'])

  return {'pe_table': raw['pe_table'],
          'wemb': jnp.asarray(wemb, dtype=jnp.bfloat16),
          'pmlp': jnp.asarray(pmlp, dtype=jnp.bfloat16),
          'pconst': jnp.asarray(pconst, dtype=jnp.float32)}


# ------------------------------ pure-JAX reference ----------------------------

def reference_forward(raw, x, t, x_t, y):
  def lrelu(v):
    return jnp.where(v > 0, v, 0.2 * v)
  bs = x.shape[0]
  xs = x[:, :, 0, :].transpose(2, 0, 1)                       # [15, B, 203]
  xts = x_t[:, :, 0, :].transpose(2, 0, 1)
  h_x = xs @ raw['wpose'] + raw['bpose']
  h_xt = xts @ raw['wpose'] + raw['bpose']
  pe_t = raw['pe_table'][t]
  t0 = pe_t @ raw['wt1'] + raw['bt1']
  t0 = t0 * jax.nn.sigmoid(t0)
  emb = (t0 @ raw['wt2'] + raw['bt2'])[None]                  # [1, B, 32]
  c1 = y['past_motion'][:, :, 0, :].transpose(2, 0, 1) @ raw['wfc1'] + raw['bfc1']
  c2 = (y['example_motoin'][:, :, 0] @ raw['wfc2'] + raw['bfc2'])[None]
  xseq = jnp.concatenate([c1, c2, emb, h_x, h_xt], axis=0)    # [47, B, 32]
  h = lrelu(xseq @ raw['w1'] + raw['b1'])
  h = lrelu(h @ raw['w2'] + raw['b2'])
  h = h @ raw['w3'] + raw['b3']                               # [47, B, 1]
  feat = h.transpose(1, 0, 2).reshape(bs, CAT_DIM)            # [B, 47]
  return feat @ raw['wf'] + raw['bf']


# ------------------------------------ main ------------------------------------

if __name__ == "__main__":
  key = jax.random.PRNGKey(0)
  keys = jax.random.split(key, 16)

  raw = {'pe_table': build_pe_table()}
  raw['wpose'], raw['bpose'] = init_linear(keys[0], INPUT_FEATS, LATENT)   # poseEmbedding
  raw['wfc1'], raw['bfc1'] = init_linear(keys[1], INPUT_FEATS, LATENT)     # fc1
  raw['wfc2'], raw['bfc2'] = init_linear(keys[2], EXAMPLE_FEATS, LATENT)   # fc2
  raw['wt1'], raw['bt1'] = init_linear(keys[3], LATENT, LATENT)            # time_embed[0]
  raw['wt2'], raw['bt2'] = init_linear(keys[4], LATENT, LATENT)            # time_embed[2]
  raw['w1'], raw['b1'] = init_dense(keys[5], LATENT, MLP_H1)               # layers[0]
  raw['w2'], raw['b2'] = init_dense(keys[6], MLP_H1, MLP_H2)               # layers[2]
  raw['w3'], raw['b3'] = init_dense(keys[7], MLP_H2, 1)                    # layers[4]
  raw['wf'], raw['bf'] = init_dense(keys[8], CAT_DIM, OUT_DIM)             # final_fc
  params = pack_params(raw)

  bs = 2
  x = jax.random.normal(keys[9], (bs, INPUT_FEATS, 1, NFRAMES), jnp.float32)
  x_t = jax.random.normal(keys[10], (bs, INPUT_FEATS, 1, NFRAMES), jnp.float32)
  t = jax.random.randint(keys[11], (bs,), 0, MAX_LEN)
  y = {
      'past_motion': jax.random.normal(keys[12], (bs, INPUT_FEATS, 1, PAST_LEN), jnp.float32),
      'example_motoin': jax.random.normal(keys[13], (bs, EXAMPLE_FEATS, 1), jnp.float32),
  }

  fwd = jax.jit(gan_discriminator_forward)
  out = fwd(params, x, t, x_t, y)
  jax.block_until_ready(out)
  assert out.shape == (bs, OUT_DIM) and out.dtype == jnp.float32

  ref = reference_forward(raw, x, t, x_t, y)
  # bf16 operands / f32 accumulate -> loosened (but still tight) tolerance.
  np.testing.assert_allclose(np.asarray(out), np.asarray(ref), rtol=2e-2, atol=2e-2)
  print("KERNEL_OK")
</pallas_src>

<mosaic_0001>
module attributes {stable_mosaic.version = 11 : i64} {
  func.func @gan_disc_fused_kernel(%arg0: memref<96x256xbf16, #tpu.memory_space<vmem>>, %arg1: memref<256x128xbf16, #tpu.memory_space<vmem>>, %arg2: memref<320x256xbf16, #tpu.memory_space<vmem>>, %arg3: memref<136x256xf32, #tpu.memory_space<vmem>>, %arg4: memref<2x128xf32, #tpu.memory_space<vmem>>) attributes {dimension_semantics = [], scalar_prefetch = 0 : i64, scratch_operands = 0 : i64, tpu.core_type = #tpu.core_type<tc>} {
    %c0 = arith.constant 0 : index
    %c0_0 = arith.constant 0 : index
    %0 = vector.load %arg2[%c0, %c0_0] : memref<320x256xbf16, #tpu.memory_space<vmem>>, vector<32x256xbf16>
    %c32 = arith.constant 32 : index
    %c0_1 = arith.constant 0 : index
    %1 = vector.load %arg2[%c32, %c0_1] : memref<320x256xbf16, #tpu.memory_space<vmem>>, vector<32x32xbf16>
    %c64 = arith.constant 64 : index
    %c0_2 = arith.constant 0 : index
    %2 = vector.load %arg2[%c64, %c0_2] : memref<320x256xbf16, #tpu.memory_space<vmem>>, vector<256x128xbf16>
    %c0_3 = arith.constant 0 : index
    %c0_4 = arith.constant 0 : index
    %3 = vector.load %arg3[%c0_3, %c0_4] : memref<136x256xf32, #tpu.memory_space<vmem>>, vector<48x128xf32>
    %c0_5 = arith.constant 0 : index
    %c128 = arith.constant 128 : index
    %4 = vector.load %arg3[%c0_5, %c128] : memref<136x256xf32, #tpu.memory_space<vmem>>, vector<48x128xf32>
    %5 = vector.extract_strided_slice %4 {offsets = [0, 0], sizes = [48, 32], strides = [1, 1]} : vector<48x128xf32> to vector<48x32xf32>
    %6 = vector.extract_strided_slice %4 {offsets = [0, 32], sizes = [48, 32], strides = [1, 1]} : vector<48x128xf32> to vector<48x32xf32>
    %c48 = arith.constant 48 : index
    %c0_6 = arith.constant 0 : index
    %7 = vector.load %arg3[%c48, %c0_6] : memref<136x256xf32, #tpu.memory_space<vmem>>, vector<1x256xf32>
    %c56 = arith.constant 56 : index
    %c0_7 = arith.constant 0 : index
    %8 = vector.load %arg3[%c56, %c0_7] : memref<136x256xf32, #tpu.memory_space<vmem>>, vector<1x128xf32>
    %c64_8 = arith.constant 64 : index
    %c0_9 = arith.constant 0 : index
    %9 = vector.load %arg3[%c64_8, %c0_9] : memref<136x256xf32, #tpu.memory_space<vmem>>, vector<1x32xf32>
    %c72 = arith.constant 72 : index
    %c0_10 = arith.constant 0 : index
    %10 = vector.load %arg3[%c72, %c0_10] : memref<136x256xf32, #tpu.memory_space<vmem>>, vector<1x128xf32>
    %c80 = arith.constant 80 : index
    %c0_11 = arith.constant 0 : index
    %11 = vector.load %arg3[%c80, %c0_11] : memref<136x256xf32, #tpu.memory_space<vmem>>, vector<1x128xf32>
    %c88 = arith.constant 88 : index
    %c0_12 = arith.constant 0 : index
    %12 = vector.load %arg3[%c88, %c0_12] : memref<136x256xf32, #tpu.memory_space<vmem>>, vector<48x128xf32>
    %c0_13 = arith.constant 0 : index
    %c0_14 = arith.constant 0 : index
    %13 = vector.load %arg0[%c0_13, %c0_14] : memref<96x256xbf16, #tpu.memory_space<vmem>>, vector<96x256xbf16>
    %c0_15 = arith.constant 0 : index
    %c0_16 = arith.constant 0 : index
    %14 = vector.load %arg1[%c0_15, %c0_16] : memref<256x128xbf16, #tpu.memory_space<vmem>>, vector<256x128xbf16>
    %cst = arith.constant dense<0.000000e+00> : vector<96x128xf32>
    %15 = tpu.matmul %13, %14, %cst {dimension_numbers = #tpu.dot_dimension_numbers<[1], [0], [0], [1], [0, 0, 1, 1], [], []>} : vector<96x256xbf16>, vector<256x128xbf16>, vector<96x128xf32> -> vector<96x128xf32>
    %16 = vector.shape_cast %15 : vector<96x128xf32> to vector<2x48x128xf32>
    %17 = vector.shape_cast %3 : vector<48x128xf32> to vector<1x48x128xf32>
    %18 = vector.broadcast %17 : vector<1x48x128xf32> to vector<2x48x128xf32>
    %19 = arith.mulf %16, %18 : vector<2x48x128xf32>
    %20 = vector.extract_strided_slice %19 {offsets = [0, 0, 0], sizes = [2, 48, 32], strides = [1, 1, 1]} : vector<2x48x128xf32> to vector<2x48x32xf32>
    %21 = vector.extract_strided_slice %19 {offsets = [0, 0, 32], sizes = [2, 48, 32], strides = [1, 1, 1]} : vector<2x48x128xf32> to vector<2x48x32xf32>
    %22 = arith.addf %20, %21 : vector<2x48x32xf32>
    %23 = vector.extract_strided_slice %19 {offsets = [0, 0, 64], sizes = [2, 48, 32], strides = [1, 1, 1]} : vector<2x48x128xf32> to vector<2x48x32xf32>
    %24 = arith.addf %22, %23 : vector<2x48x32xf32>
    %25 = vector.extract_strided_slice %19 {offsets = [0, 0, 96], sizes = [2, 48, 32], strides = [1, 1, 1]} : vector<2x48x128xf32> to vector<2x48x32xf32>
    %26 = arith.addf %24, %25 : vector<2x48x32xf32>
    %27 = vector.shape_cast %5 : vector<48x32xf32> to vector<1x48x32xf32>
    %28 = vector.broadcast %27 : vector<1x48x32xf32> to vector<2x48x32xf32>
    %29 = arith.addf %26, %28 : vector<2x48x32xf32>
    %30 = arith.negf %29 : vector<2x48x32xf32>
    %31 = math.exp %30 : vector<2x48x32xf32>
    %cst_17 = arith.constant 1.000000e+00 : f32
    %32 = vector.broadcast %cst_17 : f32 to vector<2x48x32xf32>
    %33 = arith.addf %32, %31 : vector<2x48x32xf32>
    %34 = arith.divf %32, %33 : vector<2x48x32xf32>
    %35 = arith.mulf %29, %34 : vector<2x48x32xf32>
    %36 = vector.shape_cast %35 : vector<2x48x32xf32> to vector<96x32xf32>
    %37 = arith.truncf %36 : vector<96x32xf32> to vector<96x32xbf16>
    %cst_18 = arith.constant dense<0.000000e+00> : vector<96x32xf32>
    %38 = tpu.matmul %37, %1, %cst_18 {dimension_numbers = #tpu.dot_dimension_numbers<[1], [0], [0], [1], [0, 0, 1, 1], [], []>} : vector<96x32xbf16>, vector<32x32xbf16>, vector<96x32xf32> -> vector<96x32xf32>
    %39 = vector.broadcast %9 : vector<1x32xf32> to vector<96x32xf32>
    %40 = arith.addf %38, %39 : vector<96x32xf32>
    %41 = vector.shape_cast %40 : vector<96x32xf32> to vector<2x48x32xf32>
    %42 = arith.subf %41, %29 : vector<2x48x32xf32>
    %43 = vector.shape_cast %6 : vector<48x32xf32> to vector<1x48x32xf32>
    %44 = vector.broadcast %43 : vector<1x48x32xf32> to vector<2x48x32xf32>
    %45 = arith.mulf %42, %44 : vector<2x48x32xf32>
    %46 = arith.addf %29, %45 : vector<2x48x32xf32>
    %47 = vector.shape_cast %46 : vector<2x48x32xf32> to vector<96x32xf32>
    %48 = arith.truncf %47 : vector<96x32xf32> to vector<96x32xbf16>
    %cst_19 = arith.constant dense<0.000000e+00> : vector<96x256xf32>
    %49 = tpu.matmul %48, %0, %cst_19 {dimension_numbers = #tpu.dot_dimension_numbers<[1], [0], [0], [1], [0, 0, 1, 1], [], []>} : vector<96x32xbf16>, vector<32x256xbf16>, vector<96x256xf32> -> vector<96x256xf32>
    %50 = vector.broadcast %7 : vector<1x256xf32> to vector<96x256xf32>
    %51 = arith.addf %49, %50 : vector<96x256xf32>
    %cst_20 = arith.constant 2.000000e-01 : f32
    %52 = vector.broadcast %cst_20 : f32 to vector<96x256xf32>
    %53 = arith.mulf %52, %51 : vector<96x256xf32>
    %54 = arith.maximumf %51, %53 : vector<96x256xf32>
    %55 = arith.truncf %54 : vector<96x256xf32> to vector<96x256xbf16>
    %cst_21 = arith.constant dense<0.000000e+00> : vector<96x128xf32>
    %56 = tpu.matmul %55, %2, %cst_21 {dimension_numbers = #tpu.dot_dimension_numbers<[1], [0], [0], [1], [0, 0, 1, 1], [], []>} : vector<96x256xbf16>, vector<256x128xbf16>, vector<96x128xf32> -> vector<96x128xf32>
    %57 = vector.broadcast %8 : vector<1x128xf32> to vector<96x128xf32>
    %58 = arith.addf %56, %57 : vector<96x128xf32>
    %cst_22 = arith.constant 2.000000e-01 : f32
    %59 = vector.broadcast %cst_22 : f32 to vector<96x128xf32>
    %60 = arith.mulf %59, %58 : vector<96x128xf32>
    %61 = arith.maximumf %58, %60 : vector<96x128xf32>
    %62 = vector.shape_cast %61 : vector<96x128xf32> to vector<2x48x128xf32>
    %63 = vector.shape_cast %10 : vector<1x128xf32> to vector<1x1x128xf32>
    %64 = vector.broadcast %63 : vector<1x1x128xf32> to vector<2x48x128xf32>
    %65 = arith.mulf %62, %64 : vector<2x48x128xf32>
    %cst_23 = arith.constant dense<0.000000e+00> : vector<2x48xf32>
    %66 = vector.multi_reduction <add>, %65, %cst_23 [2] : vector<2x48x128xf32> to vector<2x48xf32>
    %cst_24 = arith.constant dense<0.000000e+00> : vector<2x128xf32>
    %67 = tpu.matmul %66, %12, %cst_24 {dimension_numbers = #tpu.dot_dimension_numbers<[1], [0], [0], [1], [0, 0, 1, 1], [], []>} : vector<2x48xf32>, vector<48x128xf32>, vector<2x128xf32> -> vector<2x128xf32>
    %68 = vector.broadcast %11 : vector<1x128xf32> to vector<2x128xf32>
    %69 = arith.addf %67, %68 : vector<2x128xf32>
    %c0_25 = arith.constant 0 : index
    %c0_26 = arith.constant 0 : index
    %70 = vector.load %arg4[%c0_25, %c0_26] : memref<2x128xf32, #tpu.memory_space<vmem>>, vector<2x128xf32>
    tpu.vector_store %arg4[%c0_25, %c0_26], %69 {strides = array<i32>} : memref<2x128xf32, #tpu.memory_space<vmem>>, vector<2x128xf32>,
    return
  }
}

</mosaic_0001>

<llo_original>
// kernel: gan_discriminator_forward.1
$region0: #{gan_discriminator_forward.1}
  #allocation0 [shape = 'u32[]', space=smem, size = 0x4, offset = 0x4, fixed_abs, tag = 'smem constant byte address 0x4 - core index']
  #allocation1 [shape = 'u32[72,128]{1,0:T(1,128)}', space=vmem, size = 0x9000, scoped, tag = 'internal scratch']
  %s0 = inlined_call_operand.vmem [shape: bf16[96,256], index: 0, kind: input, shape index: {}]
  %s1 = inlined_call_operand.vmem [shape: bf16[256,128], index: 1, kind: input, shape index: {}]
  %s2 = inlined_call_operand.vmem [shape: bf16[320,256], index: 2, kind: input, shape index: {}]
  %s3 = inlined_call_operand.vmem [shape: f32[136,256], index: 3, kind: input, shape index: {}]
  %s4 = inlined_call_operand.hbm [shape: f32[2,128], index: 4, kind: output, shape index: {}]
  %s5 = sld [smem:[#allocation0]]
  $region26: #{gan_discriminator_forward.1} parent=0
    _
  %s7 = ssub.s32 1, %s5
  %s8 = scalar_select 0, %s7, %s5
  $region1: #{gan_discriminator_forward.1} parent=0
    #allocation2 [shape = 'u8[1024]{0}', space=vmem, size = 0x400, scoped, tag = 'output window, operand 0, single buffered']
    #allocation3 [shape = 's32[1]{0}', space=sflag, size = 0x4, scoped, tag = 'scoped memory for gan_discriminator_forward.1']
    %9 = vsyncpa [#allocation3], 0
    // Predicated region
    $region2: #{gan_discriminator_forward.1} parent=1 // pred_check
      _
    $region3: #{gan_discriminator_forward.1} parent=1 // pred_check_branch
      %11 = sbr.rel (0) target = $region5
    $region4: #{gan_discriminator_forward.1} parent=1 // pred_region
      _
    $region5: #{gan_discriminator_forward.1} parent=1 // pred_fallthru
      _
    // Predicated region
    $region6: #{gan_discriminator_forward.1} parent=1 // pred_check
      _
    $region7: #{gan_discriminator_forward.1} parent=1 // pred_check_branch
      %13 = sbr.rel (0) target = $region9
    $region8: #{gan_discriminator_forward.1} parent=1 // pred_region
      _
    $region9: #{gan_discriminator_forward.1} parent=1 // pred_fallthru
      _
    // Predicated region
    $region10: #{gan_discriminator_forward.1} parent=1 // pred_check
      _
    $region11: #{gan_discriminator_forward.1} parent=1 // pred_check_branch
      %15 = sbr.rel (0) target = $region13
    $region12: #{gan_discriminator_forward.1} parent=1 // pred_region
      _
    $region13: #{gan_discriminator_forward.1} parent=1 // pred_fallthru
      _
    // Predicated region
    $region14: #{gan_discriminator_forward.1} parent=1 // pred_check
      _
    $region15: #{gan_discriminator_forward.1} parent=1 // pred_check_branch
      %17 = sbr.rel (0) target = $region17
    $region16: #{gan_discriminator_forward.1} parent=1 // pred_region
      _
    $region17: #{gan_discriminator_forward.1} parent=1 // pred_fallthru
      _
    %v19 = vld [vmem:[%s2] sm:$0xff]
    %v20 = vld [vmem:[%s2 + $0x8] sm:$0xff]
    %v21 = vld [vmem:[%s2 + $0x10] sm:$0xff]
    %v22 = vld [vmem:[%s2 + $0x18] sm:$0xff]
    %v23 = vld [vmem:[%s2 + $0x20] sm:$0xf]
    %v24 = vld [vmem:[%s2 + $0x28] sm:$0xf]
    %v25 = vld [vmem:[%s2 + $0x30] sm:$0xf]
    %v26 = vld [vmem:[%s2 + $0x38] sm:$0xf]
    %v27 = vld [vmem:[%s2 + $0x40] sm:$0xf]
    %v28 = vld [vmem:[%s2 + $0x48] sm:$0xf]
    %v29 = vld [vmem:[%s2 + $0x50] sm:$0xf]
    %v30 = vld [vmem:[%s2 + $0x58] sm:$0xf]
    %v31 = vld [vmem:[%s2 + $0x60] sm:$0xf]
    %v32 = vld [vmem:[%s2 + $0x68] sm:$0xf]
    %v33 = vld [vmem:[%s2 + $0x70] sm:$0xf]
    %v34 = vld [vmem:[%s2 + $0x78] sm:$0xf]
    %v35 = vld [vmem:[%s2 + $0x80] sm:$0xf]
    %v36 = vld [vmem:[%s2 + $0x88] sm:$0xf]
    %v37 = vld [vmem:[%s2 + $0x90] sm:$0xf]
    %v38 = vld [vmem:[%s2 + $0x98] sm:$0xf]
    %v39 = vld [vmem:[%s2 + $0xa0] sm:$0xf]
    %v40 = vld [vmem:[%s2 + $0xa8] sm:$0xf]
    %v41 = vld [vmem:[%s2 + $0xb0] sm:$0xf]
    %v42 = vld [vmem:[%s2 + $0xb8] sm:$0xf]
    %v43 = vld [vmem:[%s2 + $0xc0] sm:$0xf]
    %v44 = vld [vmem:[%s2 + $0xc8] sm:$0xf]
    %v45 = vld [vmem:[%s2 + $0xd0] sm:$0xf]
    %v46 = vld [vmem:[%s2 + $0xd8] sm:$0xf]
    %v47 = vld [vmem:[%s2 + $0xe0] sm:$0xf]
    %v48 = vld [vmem:[%s2 + $0xe8] sm:$0xf]
    %v49 = vld [vmem:[%s2 + $0xf0] sm:$0xf]
    %v50 = vld [vmem:[%s2 + $0xf8] sm:$0xf]
    %v51 = vld [vmem:[%s2 + $0x100] sm:$0xf]
    %v52 = vld [vmem:[%s2 + $0x108] sm:$0xf]
    %v53 = vld [vmem:[%s2 + $0x110] sm:$0xf]
    %v54 = vld [vmem:[%s2 + $0x118] sm:$0xf]
    %v55 = vld [vmem:[%s2 + $0x120] sm:$0xf]
    %v56 = vld [vmem:[%s2 + $0x128] sm:$0xf]
    %v57 = vld [vmem:[%s2 + $0x130] sm:$0xf]
    %v58 = vld [vmem:[%s2 + $0x138] sm:$0xf]
    %v59 = vld [vmem:[%s3] sm:$0xff]
    %v60 = vld [vmem:[%s3 + $0x10] sm:$0xff]
    %v61 = vld [vmem:[%s3 + $0x20] sm:$0xff]
    %v62 = vld [vmem:[%s3 + $0x30] sm:$0xff]
    %v63 = vld [vmem:[%s3 + $0x40] sm:$0xff]
    %v64 = vld [vmem:[%s3 + $0x50] sm:$0xff]
    %v65 = vld [vmem:[%s3 + $0x8] sm:$0xff]
    %v66 = vld [vmem:[%s3 + $0x18] sm:$0xff]
    %v67 = vld [vmem:[%s3 + $0x28] sm:$0xff]
    %v68 = vld [vmem:[%s3 + $0x38] sm:$0xff]
    %v69 = vld [vmem:[%s3 + $0x48] sm:$0xff]
    %v70 = vld [vmem:[%s3 + $0x58] sm:$0xff]
    %s71 = scalar_lea.vmem %s3, 96
    %v72 = vld [vmem:[%s71] ss:$8 sm:$0x3]
    %v73 = vld [vmem:[%s3 + $0x70] ss:$0 sm:$0xff]
    %v74 = vld [vmem:[%s3 + $0x80] ss:$0 sm:$0xff]
    %v75 = vld [vmem:[%s3 + $0x90] ss:$0 sm:$0xff]
    %v76 = vld [vmem:[%s3 + $0xa0] ss:$0 sm:$0xff]
    %v77 = vld [vmem:[%s3 + $0xb0] sm:$0xff]
    %v78 = vld [vmem:[%s3 + $0xc0] sm:$0xff]
    %v79 = vld [vmem:[%s3 + $0xd0] sm:$0xff]
    %v80 = vld [vmem:[%s3 + $0xe0] sm:$0xff]
    %v81 = vld [vmem:[%s3 + $0xf0] sm:$0xff]
    %v82 = vld [vmem:[%s3 + $0x100] sm:$0xff]
    %v83 = vld [vmem:[%s0] sm:$0xff]
    %v84 = vld [vmem:[%s0 + $0x8] sm:$0xff]
    %v85 = vld [vmem:[%s0 + $0x10] sm:$0xff]
    %v86 = vld [vmem:[%s0 + $0x18] sm:$0xff]
    %v87 = vld [vmem:[%s0 + $0x20] sm:$0xff]
    %v88 = vld [vmem:[%s0 + $0x28] sm:$0xff]
    %v89 = vld [vmem:[%s0 + $0x30] sm:$0xff]
    %v90 = vld [vmem:[%s0 + $0x38] sm:$0xff]
    %v91 = vld [vmem:[%s0 + $0x40] sm:$0xff]
    %v92 = vld [vmem:[%s0 + $0x48] sm:$0xff]
    %v93 = vld [vmem:[%s0 + $0x50] sm:$0xff]
    %v94 = vld [vmem:[%s0 + $0x58] sm:$0xff]
    %v95 = vld [vmem:[%s1] sm:$0xf]
    %v96 = vld [vmem:[%s1 + $0x4] sm:$0xf]
    %v97 = vld [vmem:[%s1 + $0x8] sm:$0xf]
    %v98 = vld [vmem:[%s1 + $0xc] sm:$0xf]
    %v99 = vld [vmem:[%s1 + $0x10] sm:$0xf]
    %v100 = vld [vmem:[%s1 + $0x14] sm:$0xf]
    %v101 = vld [vmem:[%s1 + $0x18] sm:$0xf]
    %v102 = vld [vmem:[%s1 + $0x1c] sm:$0xf]
    %v103 = vld [vmem:[%s1 + $0x20] sm:$0xf]
    %v104 = vld [vmem:[%s1 + $0x24] sm:$0xf]
    %v105 = vld [vmem:[%s1 + $0x28] sm:$0xf]
    %v106 = vld [vmem:[%s1 + $0x2c] sm:$0xf]
    %v107 = vld [vmem:[%s1 + $0x30] sm:$0xf]
    %v108 = vld [vmem:[%s1 + $0x34] sm:$0xf]
    %v109 = vld [vmem:[%s1 + $0x38] sm:$0xf]
    %v110 = vld [vmem:[%s1 + $0x3c] sm:$0xf]
    %v111 = vld [vmem:[%s1 + $0x40] sm:$0xf]
    %v112 = vld [vmem:[%s1 + $0x44] sm:$0xf]
    %v113 = vld [vmem:[%s1 + $0x48] sm:$0xf]
    %v114 = vld [vmem:[%s1 + $0x4c] sm:$0xf]
    %v115 = vld [vmem:[%s1 + $0x50] sm:$0xf]
    %v116 = vld [vmem:[%s1 + $0x54] sm:$0xf]
    %v117 = vld [vmem:[%s1 + $0x58] sm:$0xf]
    %v118 = vld [vmem:[%s1 + $0x5c] sm:$0xf]
    %v119 = vld [vmem:[%s1 + $0x60] sm:$0xf]
    %v120 = vld [vmem:[%s1 + $0x64] sm:$0xf]
    %v121 = vld [vmem:[%s1 + $0x68] sm:$0xf]
    %v122 = vld [vmem:[%s1 + $0x6c] sm:$0xf]
    %v123 = vld [vmem:[%s1 + $0x70] sm:$0xf]
    %v124 = vld [vmem:[%s1 + $0x74] sm:$0xf]
    %v125 = vld [vmem:[%s1 + $0x78] sm:$0xf]
    %v126 = vld [vmem:[%s1 + $0x7c] sm:$0xf]
    %v139 = vunpack.c.l.b16 %v83
    %v140 = vunpack.c.h.b16 %v83
    %v141 = vunpack.c.l.b16 %v84
    %v142 = vunpack.c.h.b16 %v84
    %v143 = vunpack.c.l.b16 %v85
    %v144 = vunpack.c.h.b16 %v85
    %v145 = vunpack.c.l.b16 %v86
    %v146 = vunpack.c.h.b16 %v86
    %v147 = vunpack.c.l.b16 %v87
    %v148 = vunpack.c.h.b16 %v87
    %v149 = vunpack.c.l.b16 %v88
    %v150 = vunpack.c.h.b16 %v88
    %v151 = vunpack.c.l.b16 %v89
    %v152 = vunpack.c.h.b16 %v89
    %v153 = vunpack.c.l.b16 %v90
    %v154 = vunpack.c.h.b16 %v90
    %v155 = vunpack.c.l.b16 %v91
    %v156 = vunpack.c.h.b16 %v91
    %v157 = vunpack.c.l.b16 %v92
    %v158 = vunpack.c.h.b16 %v92
    %v159 = vunpack.c.l.b16 %v93
    %v160 = vunpack.c.h.b16 %v93
    %v161 = vunpack.c.l.b16 %v94
    %v162 = vunpack.c.h.b16 %v94
    %v163 = vpack.c.b16 %v141, %v139
    %v164 = vpack.c.b16 %v142, %v140
    %v165 = vpack.c.b16 %v145, %v143
    %v166 = vpack.c.b16 %v146, %v144
    %v167 = vpack.c.b16 %v149, %v147
    %v168 = vpack.c.b16 %v150, %v148
    %v169 = vpack.c.b16 %v153, %v151
    %v170 = vpack.c.b16 %v154, %v152
    %v171 = vpack.c.b16 %v157, %v155
    %v172 = vpack.c.b16 %v158, %v156
    %v173 = vpack.c.b16 %v161, %v159
    %v174 = vpack.c.b16 %v162, %v160
    %v219 = vunpack.c.l.b16 %v95
    %v220 = vunpack.c.l.b16 %v96
    %v221 = vunpack.c.l.b16 %v97
    %v222 = vunpack.c.l.b16 %v98
    %v223 = vunpack.c.l.b16 %v99
    %v224 = vunpack.c.l.b16 %v100
    %v225 = vunpack.c.l.b16 %v101
    %v226 = vunpack.c.l.b16 %v102
    %v227 = vunpack.c.l.b16 %v103
    %v228 = vunpack.c.l.b16 %v104
    %v229 = vunpack.c.l.b16 %v105
    %v230 = vunpack.c.l.b16 %v106
    %v231 = vunpack.c.l.b16 %v107
    %v232 = vunpack.c.l.b16 %v108
    %v233 = vunpack.c.l.b16 %v109
    %v234 = vunpack.c.l.b16 %v110
    %v235 = vunpack.c.l.b16 %v111
    %v236 = vunpack.c.l.b16 %v112
    %v237 = vunpack.c.l.b16 %v113
    %v238 = vunpack.c.l.b16 %v114
    %v239 = vunpack.c.l.b16 %v115
    %v240 = vunpack.c.l.b16 %v116
    %v241 = vunpack.c.l.b16 %v117
    %v242 = vunpack.c.l.b16 %v118
    %v243 = vunpack.c.l.b16 %v119
    %v244 = vunpack.c.l.b16 %v120
    %v245 = vunpack.c.l.b16 %v121
    %v246 = vunpack.c.l.b16 %v122
    %v247 = vunpack.c.l.b16 %v123
    %v248 = vunpack.c.l.b16 %v124
    %v249 = vunpack.c.l.b16 %v125
    %v250 = vunpack.c.l.b16 %v126
    %v251 = vpack.c.b16 %v220, %v219
    %v252 = vpack.c.b16 %v222, %v221
    %v253 = vpack.c.b16 %v224, %v223
    %v254 = vpack.c.b16 %v226, %v225
    %v255 = vpack.c.b16 %v228, %v227
    %v256 = vpack.c.b16 %v230, %v229
    %v257 = vpack.c.b16 %v232, %v231
    %v258 = vpack.c.b16 %v234, %v233
    %v259 = vpack.c.b16 %v236, %v235
    %v260 = vpack.c.b16 %v238, %v237
    %v261 = vpack.c.b16 %v240, %v239
    %v262 = vpack.c.b16 %v242, %v241
    %v263 = vpack.c.b16 %v244, %v243
    %v264 = vpack.c.b16 %v246, %v245
    %v265 = vpack.c.b16 %v248, %v247
    %v266 = vpack.c.b16 %v250, %v249
    %283 = vmatpush.bf16.msra.mxu0 %v258
    %284 = vmatpush.bf16.msra.mxu0 %v257
    %285 = vmatpush.bf16.msra.mxu0 %v256
    %286 = vmatpush.bf16.msra.mxu0 %v255
    %287 = vmatpush.bf16.msra.mxu0 %v254
    %288 = vmatpush.bf16.msra.mxu0 %v253
    %289 = vmatpush.bf16.msra.mxu0 %v252
    %290 = vmatpush.bf16.msra.mxu0 %v251
    %291 = vmatmul.bf16.gmra.mxu0 %v163
    %v292 = vpop.f32.mrf.mxu0
    %v293 = vadd.f32 0.0, %v292
    %v294 = vpop.f32.mrf.mxu0
    %v295 = vadd.f32 0.0, %v294
    %296 = vmatmul.bf16.gmra.mxu0 %v165
    %v297 = vpop.f32.mrf.mxu0
    %v298 = vadd.f32 0.0, %v297
    %v299 = vpop.f32.mrf.mxu0
    %v300 = vadd.f32 0.0, %v299
    %301 = vmatmul.bf16.gmra.mxu0 %v167
    %v302 = vpop.f32.mrf.mxu0
    %v303 = vadd.f32 0.0, %v302
    %v304 = vpop.f32.mrf.mxu0
    %v305 = vadd.f32 0.0, %v304
    %306 = vmatmul.bf16.gmra.mxu0 %v169
    %v307 = vpop.f32.mrf.mxu0
    %v308 = vadd.f32 0.0, %v307
    %v309 = vpop.f32.mrf.mxu0
    %v310 = vadd.f32 0.0, %v309
    %311 = vmatmul.bf16.gmra.mxu0 %v171
    %v312 = vpop.f32.mrf.mxu0
    %v313 = vadd.f32 0.0, %v312
    %v314 = vpop.f32.mrf.mxu0
    %v315 = vadd.f32 0.0, %v314
    %316 = vmatmul.bf16.gmra.mxu0 %v173
    %v317 = vpop.f32.mrf.mxu0
    %v318 = vadd.f32 0.0, %v317
    %v319 = vpop.f32.mrf.mxu0
    %v320 = vadd.f32 0.0, %v319
    %321 = vdwg.mxu0
    %322 = vmatpush.bf16.msra.mxu0 %v266
    %323 = vmatpush.bf16.msra.mxu0 %v265
    %324 = vmatpush.bf16.msra.mxu0 %v264
    %325 = vmatpush.bf16.msra.mxu0 %v263
    %326 = vmatpush.bf16.msra.mxu0 %v262
    %327 = vmatpush.bf16.msra.mxu0 %v261
    %328 = vmatpush.bf16.msra.mxu0 %v260
    %329 = vmatpush.bf16.msra.mxu0 %v259
    %330 = vmatmul.bf16.gmra.mxu0 %v164
    %v331 = vpop.f32.mrf.mxu0
    %v332 = vadd.f32 %v293, %v331
    %v333 = vpop.f32.mrf.mxu0
    %v334 = vadd.f32 %v295, %v333
    %335 = vmatmul.bf16.gmra.mxu0 %v166
    %v336 = vpop.f32.mrf.mxu0
    %v337 = vadd.f32 %v298, %v336
    %v338 = vpop.f32.mrf.mxu0
    %v339 = vadd.f32 %v300, %v338
    %340 = vmatmul.bf16.gmra.mxu0 %v168
    %v341 = vpop.f32.mrf.mxu0
    %v342 = vadd.f32 %v303, %v341
    %v343 = vpop.f32.mrf.mxu0
    %v344 = vadd.f32 %v305, %v343
    %345 = vmatmul.bf16.gmra.mxu0 %v170
    %v346 = vpop.f32.mrf.mxu0
    %v347 = vadd.f32 %v308, %v346
    %v348 = vpop.f32.mrf.mxu0
    %v349 = vadd.f32 %v310, %v348
    %350 = vmatmul.bf16.gmra.mxu0 %v172
    %v351 = vpop.f32.mrf.mxu0
    %v352 = vadd.f32 %v313, %v351
    %v353 = vpop.f32.mrf.mxu0
    %v354 = vadd.f32 %v315, %v353
    %355 = vmatmul.bf16.gmra.mxu0 %v174
    %v356 = vpop.f32.mrf.mxu0
    %v357 = vadd.f32 %v318, %v356
    %v358 = vpop.f32.mrf.mxu0
    %v359 = vadd.f32 %v320, %v358
    %360 = vdwg.mxu0
    %v361 = vmul.f32 %v332, %v59
    %v362 = vmul.f32 %v334, %v60
    %v363 = vmul.f32 %v337, %v61
    %v364 = vmul.f32 %v339, %v62
    %v365 = vmul.f32 %v342, %v63
    %v366 = vmul.f32 %v344, %v64
    %v367 = vmul.f32 %v347, %v59
    %v368 = vmul.f32 %v349, %v60
    %v369 = vmul.f32 %v352, %v61
    %v370 = vmul.f32 %v354, %v62
    %v371 = vmul.f32 %v357, %v63
    %v372 = vmul.f32 %v359, %v64
    %385 = vrot.lane.b32.xlu0 %v361, 96
    %v386 = vpop.permute.xlu0 %385
    %387 = vrot.lane.b32.xlu0 %v362, 96
    %v388 = vpop.permute.xlu0 %387
    %389 = vrot.lane.b32.xlu0 %v363, 96
    %v390 = vpop.permute.xlu0 %389
    %391 = vrot.lane.b32.xlu0 %v364, 96
    %v392 = vpop.permute.xlu0 %391
    %393 = vrot.lane.b32.xlu0 %v365, 96
    %v394 = vpop.permute.xlu0 %393
    %395 = vrot.lane.b32.xlu0 %v366, 96
    %v396 = vpop.permute.xlu0 %395
    %397 = vrot.lane.b32.xlu0 %v367, 96
    %v398 = vpop.permute.xlu0 %397
    %399 = vrot.lane.b32.xlu0 %v368, 96
    %v400 = vpop.permute.xlu0 %399
    %401 = vrot.lane.b32.xlu0 %v369, 96
    %v402 = vpop.permute.xlu0 %401
    %403 = vrot.lane.b32.xlu0 %v370, 96
    %v404 = vpop.permute.xlu0 %403
    %405 = vrot.lane.b32.xlu0 %v371, 96
    %v406 = vpop.permute.xlu0 %405
    %407 = vrot.lane.b32.xlu0 %v372, 96
    %v408 = vpop.permute.xlu0 %407
    %v421 = vadd.f32 %v361, %v386
    %v422 = vadd.f32 %v362, %v388
    %v423 = vadd.f32 %v363, %v390
    %v424 = vadd.f32 %v364, %v392
    %v425 = vadd.f32 %v365, %v394
    %v426 = vadd.f32 %v366, %v396
    %v427 = vadd.f32 %v367, %v398
    %v428 = vadd.f32 %v368, %v400
    %v429 = vadd.f32 %v369, %v402
    %v430 = vadd.f32 %v370, %v404
    %v431 = vadd.f32 %v371, %v406
    %v432 = vadd.f32 %v372, %v408
    %433 = vrot.lane.b32.xlu0 %v361, 64
    %v434 = vpop.permute.xlu0 %433
    %435 = vrot.lane.b32.xlu0 %v362, 64
    %v436 = vpop.permute.xlu0 %435
    %437 = vrot.lane.b32.xlu0 %v363, 64
    %v438 = vpop.permute.xlu0 %437
    %439 = vrot.lane.b32.xlu0 %v364, 64
    %v440 = vpop.permute.xlu0 %439
    %441 = vrot.lane.b32.xlu0 %v365, 64
    %v442 = vpop.permute.xlu0 %441
    %443 = vrot.lane.b32.xlu0 %v366, 64
    %v444 = vpop.permute.xlu0 %443
    %445 = vrot.lane.b32.xlu0 %v367, 64
    %v446 = vpop.permute.xlu0 %445
    %447 = vrot.lane.b32.xlu0 %v368, 64
    %v448 = vpop.permute.xlu0 %447
    %449 = vrot.lane.b32.xlu0 %v369, 64
    %v450 = vpop.permute.xlu0 %449
    %451 = vrot.lane.b32.xlu0 %v370, 64
    %v452 = vpop.permute.xlu0 %451
    %453 = vrot.lane.b32.xlu0 %v371, 64
    %v454 = vpop.permute.xlu0 %453
    %455 = vrot.lane.b32.xlu0 %v372, 64
    %v456 = vpop.permute.xlu0 %455
    %v469 = vadd.f32 %v421, %v434
    %v470 = vadd.f32 %v422, %v436
    %v471 = vadd.f32 %v423, %v438
    %v472 = vadd.f32 %v424, %v440
    %v473 = vadd.f32 %v425, %v442
    %v474 = vadd.f32 %v426, %v444
    %v475 = vadd.f32 %v427, %v446
    %v476 = vadd.f32 %v428, %v448
    %v477 = vadd.f32 %v429, %v450
    %v478 = vadd.f32 %v430, %v452
    %v479 = vadd.f32 %v431, %v454
    %v480 = vadd.f32 %v432, %v456
    %481 = vrot.lane.b32.xlu0 %v361, 32
    %v482 = vpop.permute.xlu0 %481
    %483 = vrot.lane.b32.xlu0 %v362, 32
    %v484 = vpop.permute.xlu0 %483
    %485 = vrot.lane.b32.xlu0 %v363, 32
    %v486 = vpop.permute.xlu0 %485
    %487 = vrot.lane.b32.xlu0 %v364, 32
    %v488 = vpop.permute.xlu0 %487
    %489 = vrot.lane.b32.xlu0 %v365, 32
    %v490 = vpop.permute.xlu0 %489
    %491 = vrot.lane.b32.xlu0 %v366, 32
    %v492 = vpop.permute.xlu0 %491
    %493 = vrot.lane.b32.xlu0 %v367, 32
    %v494 = vpop.permute.xlu0 %493
    %495 = vrot.lane.b32.xlu0 %v368, 32
    %v496 = vpop.permute.xlu0 %495
    %497 = vrot.lane.b32.xlu0 %v369, 32
    %v498 = vpop.permute.xlu0 %497
    %499 = vrot.lane.b32.xlu0 %v370, 32
    %v500 = vpop.permute.xlu0 %499
    %501 = vrot.lane.b32.xlu0 %v371, 32
    %v502 = vpop.permute.xlu0 %501
    %503 = vrot.lane.b32.xlu0 %v372, 32
    %v504 = vpop.permute.xlu0 %503
    %v517 = vadd.f32 %v469, %v482
    %v518 = vadd.f32 %v470, %v484
    %v519 = vadd.f32 %v471, %v486
    %v520 = vadd.f32 %v472, %v488
    %v521 = vadd.f32 %v473, %v490
    %v522 = vadd.f32 %v474, %v492
    %v523 = vadd.f32 %v475, %v494
    %v524 = vadd.f32 %v476, %v496
    %v525 = vadd.f32 %v477, %v498
    %v526 = vadd.f32 %v478, %v500
    %v527 = vadd.f32 %v479, %v502
    %v528 = vadd.f32 %v480, %v504
    %v529 = vadd.f32 %v517, %v65
    %v530 = vadd.f32 %v518, %v66
    %v531 = vadd.f32 %v519, %v67
    %v532 = vadd.f32 %v520, %v68
    %v533 = vadd.f32 %v521, %v69
    %v534 = vadd.f32 %v522, %v70
    %v535 = vadd.f32 %v523, %v65
    %v536 = vadd.f32 %v524, %v66
    %v537 = vadd.f32 %v525, %v67
    %v538 = vadd.f32 %v526, %v68
    %v539 = vadd.f32 %v527, %v69
    %v540 = vadd.f32 %v528, %v70
    %v541 = vxor.u32 %v529, 2147483648
    %v542 = vxor.u32 %v530, 2147483648
    %v543 = vxor.u32 %v531, 2147483648
    %v544 = vxor.u32 %v532, 2147483648
    %v545 = vxor.u32 %v533, 2147483648
    %v546 = vxor.u32 %v534, 2147483648
    %v547 = vxor.u32 %v535, 2147483648
    %v548 = vxor.u32 %v536, 2147483648
    %v549 = vxor.u32 %v537, 2147483648
    %v550 = vxor.u32 %v538, 2147483648
    %v551 = vxor.u32 %v539, 2147483648
    %v552 = vxor.u32 %v540, 2147483648
    %v553 = vmul.f32 %v541, 1.442695
    %v554 = vpow.pop %v553
    %v555 = vmul.f32 %v542, 1.442695
    %v556 = vpow.pop %v555
    %v557 = vmul.f32 %v543, 1.442695
    %v558 = vpow.pop %v557
    %v559 = vmul.f32 %v544, 1.442695
    %v560 = vpow.pop %v559
    %v561 = vmul.f32 %v545, 1.442695
    %v562 = vpow.pop %v561
    %v563 = vmul.f32 %v546, 1.442695
    %v564 = vpow.pop %v563
    %v565 = vmul.f32 %v547, 1.442695
    %v566 = vpow.pop %v565
    %v567 = vmul.f32 %v548, 1.442695
    %v568 = vpow.pop %v567
    %v569 = vmul.f32 %v549, 1.442695
    %v570 = vpow.pop %v569
    %v571 = vmul.f32 %v550, 1.442695
    %v572 = vpow.pop %v571
    %v573 = vmul.f32 %v551, 1.442695
    %v574 = vpow.pop %v573
    %v575 = vmul.f32 %v552, 1.442695
    %v576 = vpow.pop %v575
    %v577 = vadd.f32 %v554, 1.0
    %v578 = vadd.f32 %v556, 1.0
    %v579 = vadd.f32 %v558, 1.0
    %v580 = vadd.f32 %v560, 1.0
    %v581 = vadd.f32 %v562, 1.0
    %v582 = vadd.f32 %v564, 1.0
    %v583 = vadd.f32 %v566, 1.0
    %v584 = vadd.f32 %v568, 1.0
    %v585 = vadd.f32 %v570, 1.0
    %v586 = vadd.f32 %v572, 1.0
    %v587 = vadd.f32 %v574, 1.0
    %v588 = vadd.f32 %v576, 1.0
    %v589 = vrcp.pop %v577
    %v590 = vmul.f32 %v577, %v589
    %v591 = vsub.f32 1.0, %v590
    %v592 = vmul.f32 %v589, %v591
    %v593 = vadd.f32 %v589, %v592
    %vm594 = vweird.f32 %v577
    %vm595 = vweird.f32 %v589
    %vm596 = vmor %vm594, %vm595
    %v597 = vsel %vm596, %v589, %v593
    %v598 = vand.u32 2147483647, %v577
    %vm599 = vcmp.eq.f32.partialorder %v598, 8.507059e+37
    %v600 = vand.u32 %v577, 2147483648
    %v601 = vor.u32 1.1754944e-38, %v600
    %v602 = vsel %vm599, %v601, %v597
    %v603 = vmul.f32 1.0, %v602
    %v604 = vrcp.pop %v578
    %v605 = vmul.f32 %v578, %v604
    %v606 = vsub.f32 1.0, %v605
    %v607 = vmul.f32 %v604, %v606
    %v608 = vadd.f32 %v604, %v607
    %vm609 = vweird.f32 %v578
    %vm610 = vweird.f32 %v604
    %vm611 = vmor %vm609, %vm610
    %v612 = vsel %vm611, %v604, %v608
    %v613 = vand.u32 2147483647, %v578
    %vm614 = vcmp.eq.f32.partialorder %v613, 8.507059e+37
    %v615 = vand.u32 %v578, 2147483648
    %v616 = vor.u32 1.1754944e-38, %v615
    %v617 = vsel %vm614, %v616, %v612
    %v618 = vmul.f32 1.0, %v617
    %v619 = vrcp.pop %v579
    %v620 = vmul.f32 %v579, %v619
    %v621 = vsub.f32 1.0, %v620
    %v622 = vmul.f32 %v619, %v621
    %v623 = vadd.f32 %v619, %v622
    %vm624 = vweird.f32 %v579
    %vm625 = vweird.f32 %v619
    %vm626 = vmor %vm624, %vm625
    %v627 = vsel %vm626, %v619, %v623
    %v628 = vand.u32 2147483647, %v579
    %vm629 = vcmp.eq.f32.partialorder %v628, 8.507059e+37
    %v630 = vand.u32 %v579, 2147483648
    %v631 = vor.u32 1.1754944e-38, %v630
    %v632 = vsel %vm629, %v631, %v627
    %v633 = vmul.f32 1.0, %v632
    %v634 = vrcp.pop %v580
    %v635 = vmul.f32 %v580, %v634
    %v636 = vsub.f32 1.0, %v635
    %v637 = vmul.f32 %v634, %v636
    %v638 = vadd.f32 %v634, %v637
    %vm639 = vweird.f32 %v580
    %vm640 = vweird.f32 %v634
    %vm641 = vmor %vm639, %vm640
    %v642 = vsel %vm641, %v634, %v638
    %v643 = vand.u32 2147483647, %v580
    %vm644 = vcmp.eq.f32.partialorder %v643, 8.507059e+37
    %v645 = vand.u32 %v580, 2147483648
    %v646 = vor.u32 1.1754944e-38, %v645
    %v647 = vsel %vm644, %v646, %v642
    %v648 = vmul.f32 1.0, %v647
    %v649 = vrcp.pop %v581
    %v650 = vmul.f32 %v581, %v649
    %v651 = vsub.f32 1.0, %v650
    %v652 = vmul.f32 %v649, %v651
    %v653 = vadd.f32 %v649, %v652
    %vm654 = vweird.f32 %v581
    %vm655 = vweird.f32 %v649
    %vm656 = vmor %vm654, %vm655
    %v657 = vsel %vm656, %v649, %v653
    %v658 = vand.u32 2147483647, %v581
    %vm659 = vcmp.eq.f32.partialorder %v658, 8.507059e+37
    %v660 = vand.u32 %v581, 2147483648
    %v661 = vor.u32 1.1754944e-38, %v660
    %v662 = vsel %vm659, %v661, %v657
    %v663 = vmul.f32 1.0, %v662
    %v664 = vrcp.pop %v582
    %v665 = vmul.f32 %v582, %v664
    %v666 = vsub.f32 1.0, %v665
    %v667 = vmul.f32 %v664, %v666
    %v668 = vadd.f32 %v664, %v667
    %vm669 = vweird.f32 %v582
    %vm670 = vweird.f32 %v664
    %vm671 = vmor %vm669, %vm670
    %v672 = vsel %vm671, %v664, %v668
    %v673 = vand.u32 2147483647, %v582
    %vm674 = vcmp.eq.f32.partialorder %v673, 8.507059e+37
    %v675 = vand.u32 %v582, 2147483648
    %v676 = vor.u32 1.1754944e-38, %v675
    %v677 = vsel %vm674, %v676, %v672
    %v678 = vmul.f32 1.0, %v677
    %v679 = vrcp.pop %v583
    %v680 = vmul.f32 %v583, %v679
    %v681 = vsub.f32 1.0, %v680
    %v682 = vmul.f32 %v679, %v681
    %v683 = vadd.f32 %v679, %v682
    %vm684 = vweird.f32 %v583
    %vm685 = vweird.f32 %v679
    %vm686 = vmor %vm684, %vm685
    %v687 = vsel %vm686, %v679, %v683
    %v688 = vand.u32 2147483647, %v583
    %vm689 = vcmp.eq.f32.partialorder %v688, 8.507059e+37
    %v690 = vand.u32 %v583, 2147483648
    %v691 = vor.u32 1.1754944e-38, %v690
    %v692 = vsel %vm689, %v691, %v687
    %v693 = vmul.f32 1.0, %v692
    %v694 = vrcp.pop %v584
    %v695 = vmul.f32 %v584, %v694
    %v696 = vsub.f32 1.0, %v695
    %v697 = vmul.f32 %v694, %v696
    %v698 = vadd.f32 %v694, %v697
    %vm699 = vweird.f32 %v584
    %vm700 = vweird.f32 %v694
    %vm701 = vmor %vm699, %vm700
    %v702 = vsel %vm701, %v694, %v698
    %v703 = vand.u32 2147483647, %v584
    %vm704 = vcmp.eq.f32.partialorder %v703, 8.507059e+37
    %v705 = vand.u32 %v584, 2147483648
    %v706 = vor.u32 1.1754944e-38, %v705
    %v707 = vsel %vm704, %v706, %v702
    %v708 = vmul.f32 1.0, %v707
    %v709 = vrcp.pop %v585
    %v710 = vmul.f32 %v585, %v709
    %v711 = vsub.f32 1.0, %v710
    %v712 = vmul.f32 %v709, %v711
    %v713 = vadd.f32 %v709, %v712
    %vm714 = vweird.f32 %v585
    %vm715 = vweird.f32 %v709
    %vm716 = vmor %vm714, %vm715
    %v717 = vsel %vm716, %v709, %v713
    %v718 = vand.u32 2147483647, %v585
    %vm719 = vcmp.eq.f32.partialorder %v718, 8.507059e+37
    %v720 = vand.u32 %v585, 2147483648
    %v721 = vor.u32 1.1754944e-38, %v720
    %v722 = vsel %vm719, %v721, %v717
    %v723 = vmul.f32 1.0, %v722
    %v724 = vrcp.pop %v586
    %v725 = vmul.f32 %v586, %v724
    %v726 = vsub.f32 1.0, %v725
    %v727 = vmul.f32 %v724, %v726
    %v728 = vadd.f32 %v724, %v727
    %vm729 = vweird.f32 %v586
    %vm730 = vweird.f32 %v724
    %vm731 = vmor %vm729, %vm730
    %v732 = vsel %vm731, %v724, %v728
    %v733 = vand.u32 2147483647, %v586
    %vm734 = vcmp.eq.f32.partialorder %v733, 8.507059e+37
    %v735 = vand.u32 %v586, 2147483648
    %v736 = vor.u32 1.1754944e-38, %v735
    %v737 = vsel %vm734, %v736, %v732
    %v738 = vmul.f32 1.0, %v737
    %v739 = vrcp.pop %v587
    %v740 = vmul.f32 %v587, %v739
    %v741 = vsub.f32 1.0, %v740
    %v742 = vmul.f32 %v739, %v741
    %v743 = vadd.f32 %v739, %v742
    %vm744 = vweird.f32 %v587
    %vm745 = vweird.f32 %v739
    %vm746 = vmor %vm744, %vm745
    %v747 = vsel %vm746, %v739, %v743
    %v748 = vand.u32 2147483647, %v587
    %vm749 = vcmp.eq.f32.partialorder %v748, 8.507059e+37
    %v750 = vand.u32 %v587, 2147483648
    %v751 = vor.u32 1.1754944e-38, %v750
    %v752 = vsel %vm749, %v751, %v747
    %v753 = vmul.f32 1.0, %v752
    %v754 = vrcp.pop %v588
    %v755 = vmul.f32 %v588, %v754
    %v756 = vsub.f32 1.0, %v755
    %v757 = vmul.f32 %v754, %v756
    %v758 = vadd.f32 %v754, %v757
    %vm759 = vweird.f32 %v588
    %vm760 = vweird.f32 %v754
    %vm761 = vmor %vm759, %vm760
    %v762 = vsel %vm761, %v754, %v758
    %v763 = vand.u32 2147483647, %v588
    %vm764 = vcmp.eq.f32.partialorder %v763, 8.507059e+37
    %v765 = vand.u32 %v588, 2147483648
    %v766 = vor.u32 1.1754944e-38, %v765
    %v767 = vsel %vm764, %v766, %v762
    %v768 = vmul.f32 1.0, %v767
    %v769 = vmul.f32 %v529, %v603
    %v770 = vmul.f32 %v530, %v618
    %v771 = vmul.f32 %v531, %v633
    %v772 = vmul.f32 %v532, %v648
    %v773 = vmul.f32 %v533, %v663
    %v774 = vmul.f32 %v534, %v678
    %v775 = vmul.f32 %v535, %v693
    %v776 = vmul.f32 %v536, %v708
    %v777 = vmul.f32 %v537, %v723
    %v778 = vmul.f32 %v538, %v738
    %v779 = vmul.f32 %v539, %v753
    %v780 = vmul.f32 %v540, %v768
    %v781 = vpack.c.bf16 %v770, %v769
    %v782 = vpack.c.bf16 %v772, %v771
    %v783 = vpack.c.bf16 %v774, %v773
    %v784 = vpack.c.bf16 %v776, %v775
    %v785 = vpack.c.bf16 %v778, %v777
    %v786 = vpack.c.bf16 %v780, %v779
    %v791 = vunpack.c.l.b16 %v23
    %v792 = vunpack.c.l.b16 %v24
    %v793 = vunpack.c.l.b16 %v25
    %v794 = vunpack.c.l.b16 %v26
    %v795 = vpack.c.b16 %v792, %v791
    %v796 = vpack.c.b16 %v794, %v793
    %vm799 = vcmask 261120
    %v801 = vsel %vm799, %v781, 0
    %v804 = vsel %vm799, %v782, 0
    %v807 = vsel %vm799, %v783, 0
    %v810 = vsel %vm799, %v784, 0
    %v813 = vsel %vm799, %v785, 0
    %v816 = vsel %vm799, %v786, 0
    %818 = vmatpush.bf16.msra.mxu0 0
    %819 = vmatpush.bf16.msra.mxu0 0
    %820 = vmatpush.bf16.msra.mxu0 0
    %821 = vmatpush.bf16.msra.mxu0 0
    %822 = vmatpush.bf16.msra.mxu0 0
    %823 = vmatpush.bf16.msra.mxu0 0
    %824 = vmatpush.bf16.msra.mxu0 %v796
    %825 = vmatpush.bf16.msra.mxu0 %v795
    %826 = vmatmul.bf16.gmra.mxu0 %v801
    %v827 = vpop.f32.mrf.mxu0
    %v828 = vadd.f32 %v74, %v827
    %v829 = vpop.f32.mrf.mxu0
    %v830 = vadd.f32 %v74, %v829
    %831 = vmatmul.bf16.gmra.mxu0 %v804
    %v832 = vpop.f32.mrf.mxu0
    %v833 = vadd.f32 %v74, %v832
    %v834 = vpop.f32.mrf.mxu0
    %v835 = vadd.f32 %v74, %v834
    %836 = vmatmul.bf16.gmra.mxu0 %v807
    %v837 = vpop.f32.mrf.mxu0
    %v838 = vadd.f32 %v74, %v837
    %v839 = vpop.f32.mrf.mxu0
    %v840 = vadd.f32 %v74, %v839
    %841 = vmatmul.bf16.gmra.mxu0 %v810
    %v842 = vpop.f32.mrf.mxu0
    %v843 = vadd.f32 %v74, %v842
    %v844 = vpop.f32.mrf.mxu0
    %v845 = vadd.f32 %v74, %v844
    %846 = vmatmul.bf16.gmra.mxu0 %v813
    %v847 = vpop.f32.mrf.mxu0
    %v848 = vadd.f32 %v74, %v847
    %v849 = vpop.f32.mrf.mxu0
    %v850 = vadd.f32 %v74, %v849
    %851 = vmatmul.bf16.gmra.mxu0 %v816
    %v852 = vpop.f32.mrf.mxu0
    %v853 = vadd.f32 %v74, %v852
    %v854 = vpop.f32.mrf.mxu0
    %v855 = vadd.f32 %v74, %v854
    %856 = vdwg.mxu0
    %v857 = vsub.f32 %v828, %v529
    %v858 = vsub.f32 %v830, %v530
    %v859 = vsub.f32 %v833, %v531
    %v860 = vsub.f32 %v835, %v532
    %v861 = vsub.f32 %v838, %v533
    %v862 = vsub.f32 %v840, %v534
    %v863 = vsub.f32 %v843, %v535
    %v864 = vsub.f32 %v845, %v536
    %v865 = vsub.f32 %v848, %v537
    %v866 = vsub.f32 %v850, %v538
    %v867 = vsub.f32 %v853, %v539
    %v868 = vsub.f32 %v855, %v540
    %875 = vrot.lane.b32.xlu0 %v65, 96
    %v876 = vpop.permute.xlu0 %875
    %877 = vrot.lane.b32.xlu0 %v66, 96
    %v878 = vpop.permute.xlu0 %877
    %879 = vrot.lane.b32.xlu0 %v67, 96
    %v880 = vpop.permute.xlu0 %879
    %881 = vrot.lane.b32.xlu0 %v68, 96
    %v882 = vpop.permute.xlu0 %881
    %883 = vrot.lane.b32.xlu0 %v69, 96
    %v884 = vpop.permute.xlu0 %883
    %885 = vrot.lane.b32.xlu0 %v70, 96
    %v886 = vpop.permute.xlu0 %885
    %v893 = vmul.f32 %v857, %v876
    %v894 = vmul.f32 %v858, %v878
    %v895 = vmul.f32 %v859, %v880
    %v896 = vmul.f32 %v860, %v882
    %v897 = vmul.f32 %v861, %v884
    %v898 = vmul.f32 %v862, %v886
    %v899 = vmul.f32 %v863, %v876
    %v900 = vmul.f32 %v864, %v878
    %v901 = vmul.f32 %v865, %v880
    %v902 = vmul.f32 %v866, %v882
    %v903 = vmul.f32 %v867, %v884
    %v904 = vmul.f32 %v868, %v886
    %v905 = vadd.f32 %v529, %v893
    %v906 = vadd.f32 %v530, %v894
    %v907 = vadd.f32 %v531, %v895
    %v908 = vadd.f32 %v532, %v896
    %v909 = vadd.f32 %v533, %v897
    %v910 = vadd.f32 %v534, %v898
    %v911 = vadd.f32 %v535, %v899
    %v912 = vadd.f32 %v536, %v900
    %v913 = vadd.f32 %v537, %v901
    %v914 = vadd.f32 %v538, %v902
    %v915 = vadd.f32 %v539, %v903
    %v916 = vadd.f32 %v540, %v904
    %v917 = vpack.c.bf16 %v906, %v905
    %v918 = vpack.c.bf16 %v908, %v907
    %v919 = vpack.c.bf16 %v910, %v909
    %v920 = vpack.c.bf16 %v912, %v911
    %v921 = vpack.c.bf16 %v914, %v913
    %v922 = vpack.c.bf16 %v916, %v915
    %v924 = vperm.slane %v72, 0
    %v925 = vperm.slane %v72, 1
    %v932 = vunpack.c.l.b16 %v19
    %v933 = vunpack.c.h.b16 %v19
    %v934 = vunpack.c.l.b16 %v20
    %v935 = vunpack.c.h.b16 %v20
    %v936 = vunpack.c.l.b16 %v21
    %v937 = vunpack.c.h.b16 %v21
    %v938 = vunpack.c.l.b16 %v22
    %v939 = vunpack.c.h.b16 %v22
    %v940 = vpack.c.b16 %v934, %v932
    %v941 = vpack.c.b16 %v935, %v933
    %v942 = vpack.c.b16 %v938, %v936
    %v943 = vpack.c.b16 %v939, %v937
    %v949 = vsel %vm799, %v917, 0
    %v952 = vsel %vm799, %v918, 0
    %v955 = vsel %vm799, %v919, 0
    %v958 = vsel %vm799, %v920, 0
    %v961 = vsel %vm799, %v921, 0
    %v964 = vsel %vm799, %v922, 0
    %966 = vmatpush.bf16.msra.mxu0 0
    %967 = vmatpush.bf16.msra.mxu0 0
    %968 = vmatpush.bf16.msra.mxu0 0
    %969 = vmatpush.bf16.msra.mxu0 0
    %970 = vmatpush.bf16.msra.mxu0 0
    %971 = vmatpush.bf16.msra.mxu0 0
    %972 = vmatpush.bf16.msra.mxu0 %v942
    %973 = vmatpush.bf16.msra.mxu0 %v940
    %974 = vmatmul.bf16.gmra.mxu0 %v949
    %v975 = vpop.f32.mrf.mxu0
    %v976 = vadd.f32 %v924, %v975
    %v977 = vpop.f32.mrf.mxu0
    %v978 = vadd.f32 %v924, %v977
    %979 = vmatmul.bf16.gmra.mxu0 %v952
    %v980 = vpop.f32.mrf.mxu0
    %v981 = vadd.f32 %v924, %v980
    %v982 = vpop.f32.mrf.mxu0
    %v983 = vadd.f32 %v924, %v982
    %984 = vmatmul.bf16.gmra.mxu0 %v955
    %v985 = vpop.f32.mrf.mxu0
    %v986 = vadd.f32 %v924, %v985
    %v987 = vpop.f32.mrf.mxu0
    %v988 = vadd.f32 %v924, %v987
    %989 = vmatmul.bf16.gmra.mxu0 %v958
    %v990 = vpop.f32.mrf.mxu0
    %v991 = vadd.f32 %v924, %v990
    %v992 = vpop.f32.mrf.mxu0
    %v993 = vadd.f32 %v924, %v992
    %994 = vmatmul.bf16.gmra.mxu0 %v961
    %v995 = vpop.f32.mrf.mxu0
    %v996 = vadd.f32 %v924, %v995
    %v997 = vpop.f32.mrf.mxu0
    %v998 = vadd.f32 %v924, %v997
    %999 = vmatmul.bf16.gmra.mxu0 %v964
    %v1000 = vpop.f32.mrf.mxu0
    %v1001 = vadd.f32 %v924, %v1000
    %v1002 = vpop.f32.mrf.mxu0
    %v1003 = vadd.f32 %v924, %v1002
    %1004 = vdwg.mxu0
    %1005 = vmatpush.bf16.msra.mxu0 0
    %1006 = vmatpush.bf16.msra.mxu0 0
    %1007 = vmatpush.bf16.msra.mxu0 0
    %1008 = vmatpush.bf16.msra.mxu0 0
    %1009 = vmatpush.bf16.msra.mxu0 0
    %1010 = vmatpush.bf16.msra.mxu0 0
    %1011 = vmatpush.bf16.msra.mxu0 %v943
    %1012 = vmatpush.bf16.msra.mxu0 %v941
    %1013 = vmatmul.bf16.gmra.mxu0 %v949
    %v1014 = vpop.f32.mrf.mxu0
    %v1015 = vadd.f32 %v925, %v1014
    %v1016 = vpop.f32.mrf.mxu0
    %v1017 = vadd.f32 %v925, %v1016
    %1018 = vmatmul.bf16.gmra.mxu0 %v952
    %v1019 = vpop.f32.mrf.mxu0
    %v1020 = vadd.f32 %v925, %v1019
    %v1021 = vpop.f32.mrf.mxu0
    %v1022 = vadd.f32 %v925, %v1021
    %1023 = vmatmul.bf16.gmra.mxu0 %v955
    %v1024 = vpop.f32.mrf.mxu0
    %v1025 = vadd.f32 %v925, %v1024
    %v1026 = vpop.f32.mrf.mxu0
    %v1027 = vadd.f32 %v925, %v1026
    %1028 = vmatmul.bf16.gmra.mxu0 %v958
    %v1029 = vpop.f32.mrf.mxu0
    %v1030 = vadd.f32 %v925, %v1029
    %v1031 = vpop.f32.mrf.mxu0
    %v1032 = vadd.f32 %v925, %v1031
    %1033 = vmatmul.bf16.gmra.mxu0 %v961
    %v1034 = vpop.f32.mrf.mxu0
    %v1035 = vadd.f32 %v925, %v1034
    %v1036 = vpop.f32.mrf.mxu0
    %v1037 = vadd.f32 %v925, %v1036
    %1038 = vmatmul.bf16.gmra.mxu0 %v964
    %v1039 = vpop.f32.mrf.mxu0
    %v1040 = vadd.f32 %v925, %v1039
    %v1041 = vpop.f32.mrf.mxu0
    %v1042 = vadd.f32 %v925, %v1041
    %1043 = vdwg.mxu0
    %v1044 = vmul.f32 %v976, 0.2
    %v1045 = vmul.f32 %v1015, 0.2
    %v1046 = vmul.f32 %v978, 0.2
    %v1047 = vmul.f32 %v1017, 0.2
    %v1048 = vmul.f32 %v981, 0.2
    %v1049 = vmul.f32 %v1020, 0.2
    %v1050 = vmul.f32 %v983, 0.2
    %v1051 = vmul.f32 %v1022, 0.2
    %v1052 = vmul.f32 %v986, 0.2
    %v1053 = vmul.f32 %v1025, 0.2
    %v1054 = vmul.f32 %v988, 0.2
    %v1055 = vmul.f32 %v1027, 0.2
    %v1056 = vmul.f32 %v991, 0.2
    %v1057 = vmul.f32 %v1030, 0.2
    %v1058 = vmul.f32 %v993, 0.2
    %v1059 = vmul.f32 %v1032, 0.2
    %v1060 = vmul.f32 %v996, 0.2
    %v1061 = vmul.f32 %v1035, 0.2
    %v1062 = vmul.f32 %v998, 0.2
    %v1063 = vmul.f32 %v1037, 0.2
    %v1064 = vmul.f32 %v1001, 0.2
    %v1065 = vmul.f32 %v1040, 0.2
    %v1066 = vmul.f32 %v1003, 0.2
    %v1067 = vmul.f32 %v1042, 0.2
    %v1068 = vmax.f32 %v976, %v1044
    %v1069 = vmax.f32 %v1015, %v1045
    %v1070 = vmax.f32 %v978, %v1046
    %v1071 = vmax.f32 %v1017, %v1047
    %v1072 = vmax.f32 %v981, %v1048
    %v1073 = vmax.f32 %v1020, %v1049
    %v1074 = vmax.f32 %v983, %v1050
    %v1075 = vmax.f32 %v1022, %v1051
    %v1076 = vmax.f32 %v986, %v1052
    %v1077 = vmax.f32 %v1025, %v1053
    %v1078 = vmax.f32 %v988, %v1054
    %v1079 = vmax.f32 %v1027, %v1055
    %v1080 = vmax.f32 %v991, %v1056
    %v1081 = vmax.f32 %v1030, %v1057
    %v1082 = vmax.f32 %v993, %v1058
    %v1083 = vmax.f32 %v1032, %v1059
    %v1084 = vmax.f32 %v996, %v1060
    %v1085 = vmax.f32 %v1035, %v1061
    %v1086 = vmax.f32 %v998, %v1062
    %v1087 = vmax.f32 %v1037, %v1063
    %v1088 = vmax.f32 %v1001, %v1064
    %v1089 = vmax.f32 %v1040, %v1065
    %v1090 = vmax.f32 %v1003, %v1066
    %v1091 = vmax.f32 %v1042, %v1067
    %v1092 = vpack.c.bf16 %v1070, %v1068
    %v1093 = vpack.c.bf16 %v1071, %v1069
    %v1094 = vpack.c.bf16 %v1074, %v1072
    %v1095 = vpack.c.bf16 %v1075, %v1073
    %v1096 = vpack.c.bf16 %v1078, %v1076
    %v1097 = vpack.c.bf16 %v1079, %v1077
    %v1098 = vpack.c.bf16 %v1082, %v1080
    %v1099 = vpack.c.bf16 %v1083, %v1081
    %v1100 = vpack.c.bf16 %v1086, %v1084
    %v1101 = vpack.c.bf16 %v1087, %v1085
    %v1102 = vpack.c.bf16 %v1090, %v1088
    %v1103 = vpack.c.bf16 %v1091, %v1089
    %v1136 = vunpack.c.l.b16 %v27
    %v1137 = vunpack.c.l.b16 %v28
    %v1138 = vunpack.c.l.b16 %v29
    %v1139 = vunpack.c.l.b16 %v30
    %v1140 = vunpack.c.l.b16 %v31
    %v1141 = vunpack.c.l.b16 %v32
    %v1142 = vunpack.c.l.b16 %v33
    %v1143 = vunpack.c.l.b16 %v34
    %v1144 = vunpack.c.l.b16 %v35
    %v1145 = vunpack.c.l.b16 %v36
    %v1146 = vunpack.c.l.b16 %v37
    %v1147 = vunpack.c.l.b16 %v38
    %v1148 = vunpack.c.l.b16 %v39
    %v1149 = vunpack.c.l.b16 %v40
    %v1150 = vunpack.c.l.b16 %v41
    %v1151 = vunpack.c.l.b16 %v42
    %v1152 = vunpack.c.l.b16 %v43
    %v1153 = vunpack.c.l.b16 %v44
    %v1154 = vunpack.c.l.b16 %v45
    %v1155 = vunpack.c.l.b16 %v46
    %v1156 = vunpack.c.l.b16 %v47
    %v1157 = vunpack.c.l.b16 %v48
    %v1158 = vunpack.c.l.b16 %v49
    %v1159 = vunpack.c.l.b16 %v50
    %v1160 = vunpack.c.l.b16 %v51
    %v1161 = vunpack.c.l.b16 %v52
    %v1162 = vunpack.c.l.b16 %v53
    %v1163 = vunpack.c.l.b16 %v54
    %v1164 = vunpack.c.l.b16 %v55
    %v1165 = vunpack.c.l.b16 %v56
    %v1166 = vunpack.c.l.b16 %v57
    %v1167 = vunpack.c.l.b16 %v58
    %v1168 = vpack.c.b16 %v1137, %v1136
    %v1169 = vpack.c.b16 %v1139, %v1138
    %v1170 = vpack.c.b16 %v1141, %v1140
    %v1171 = vpack.c.b16 %v1143, %v1142
    %v1172 = vpack.c.b16 %v1145, %v1144
    %v1173 = vpack.c.b16 %v1147, %v1146
    %v1174 = vpack.c.b16 %v1149, %v1148
    %v1175 = vpack.c.b16 %v1151, %v1150
    %v1176 = vpack.c.b16 %v1153, %v1152
    %v1177 = vpack.c.b16 %v1155, %v1154
    %v1178 = vpack.c.b16 %v1157, %v1156
    %v1179 = vpack.c.b16 %v1159, %v1158
    %v1180 = vpack.c.b16 %v1161, %v1160
    %v1181 = vpack.c.b16 %v1163, %v1162
    %v1182 = vpack.c.b16 %v1165, %v1164
    %v1183 = vpack.c.b16 %v1167, %v1166
    %1200 = vmatpush.bf16.msra.mxu0 %v1175
    %1201 = vmatpush.bf16.msra.mxu0 %v1174
    %1202 = vmatpush.bf16.msra.mxu0 %v1173
    %1203 = vmatpush.bf16.msra.mxu0 %v1172
    %1204 = vmatpush.bf16.msra.mxu0 %v1171
    %1205 = vmatpush.bf16.msra.mxu0 %v1170
    %1206 = vmatpush.bf16.msra.mxu0 %v1169
    %1207 = vmatpush.bf16.msra.mxu0 %v1168
    %1208 = vmatmul.bf16.gmra.mxu0 %v1092
    %v1209 = vpop.f32.mrf.mxu0
    %v1210 = vadd.f32 %v73, %v1209
    %v1211 = vpop.f32.mrf.mxu0
    %v1212 = vadd.f32 %v73, %v1211
    %1213 = vmatmul.bf16.gmra.mxu0 %v1094
    %v1214 = vpop.f32.mrf.mxu0
    %v1215 = vadd.f32 %v73, %v1214
    %v1216 = vpop.f32.mrf.mxu0
    %v1217 = vadd.f32 %v73, %v1216
    %1218 = vmatmul.bf16.gmra.mxu0 %v1096
    %v1219 = vpop.f32.mrf.mxu0
    %v1220 = vadd.f32 %v73, %v1219
    %v1221 = vpop.f32.mrf.mxu0
    %v1222 = vadd.f32 %v73, %v1221
    %1223 = vmatmul.bf16.gmra.mxu0 %v1098
    %v1224 = vpop.f32.mrf.mxu0
    %v1225 = vadd.f32 %v73, %v1224
    %v1226 = vpop.f32.mrf.mxu0
    %v1227 = vadd.f32 %v73, %v1226
    %1228 = vmatmul.bf16.gmra.mxu0 %v1100
    %v1229 = vpop.f32.mrf.mxu0
    %v1230 = vadd.f32 %v73, %v1229
    %v1231 = vpop.f32.mrf.mxu0
    %v1232 = vadd.f32 %v73, %v1231
    %1233 = vmatmul.bf16.gmra.mxu0 %v1102
    %v1234 = vpop.f32.mrf.mxu0
    %v1235 = vadd.f32 %v73, %v1234
    %v1236 = vpop.f32.mrf.mxu0
    %v1237 = vadd.f32 %v73, %v1236
    %1238 = vdwg.mxu0
    %1239 = vmatpush.bf16.msra.mxu0 %v1183
    %1240 = vmatpush.bf16.msra.mxu0 %v1182
    %1241 = vmatpush.bf16.msra.mxu0 %v1181
    %1242 = vmatpush.bf16.msra.mxu0 %v1180
    %1243 = vmatpush.bf16.msra.mxu0 %v1179
    %1244 = vmatpush.bf16.msra.mxu0 %v1178
    %1245 = vmatpush.bf16.msra.mxu0 %v1177
    %1246 = vmatpush.bf16.msra.mxu0 %v1176
    %1247 = vmatmul.bf16.gmra.mxu0 %v1093
    %v1248 = vpop.f32.mrf.mxu0
    %v1249 = vadd.f32 %v1210, %v1248
    %v1250 = vpop.f32.mrf.mxu0
    %v1251 = vadd.f32 %v1212, %v1250
    %1252 = vmatmul.bf16.gmra.mxu0 %v1095
    %v1253 = vpop.f32.mrf.mxu0
    %v1254 = vadd.f32 %v1215, %v1253
    %v1255 = vpop.f32.mrf.mxu0
    %v1256 = vadd.f32 %v1217, %v1255
    %1257 = vmatmul.bf16.gmra.mxu0 %v1097
    %v1258 = vpop.f32.mrf.mxu0
    %v1259 = vadd.f32 %v1220, %v1258
    %v1260 = vpop.f32.mrf.mxu0
    %v1261 = vadd.f32 %v1222, %v1260
    %1262 = vmatmul.bf16.gmra.mxu0 %v1099
    %v1263 = vpop.f32.mrf.mxu0
    %v1264 = vadd.f32 %v1225, %v1263
    %v1265 = vpop.f32.mrf.mxu0
    %v1266 = vadd.f32 %v1227, %v1265
    %1267 = vmatmul.bf16.gmra.mxu0 %v1101
    %v1268 = vpop.f32.mrf.mxu0
    %v1269 = vadd.f32 %v1230, %v1268
    %v1270 = vpop.f32.mrf.mxu0
    %v1271 = vadd.f32 %v1232, %v1270
    %1272 = vmatmul.bf16.gmra.mxu0 %v1103
    %v1273 = vpop.f32.mrf.mxu0
    %v1274 = vadd.f32 %v1235, %v1273
    %v1275 = vpop.f32.mrf.mxu0
    %v1276 = vadd.f32 %v1237, %v1275
    %1277 = vdwg.mxu0
    %v1278 = vmul.f32 %v1249, 0.2
    %v1279 = vmul.f32 %v1251, 0.2
    %v1280 = vmul.f32 %v1254, 0.2
    %v1281 = vmul.f32 %v1256, 0.2
    %v1282 = vmul.f32 %v1259, 0.2
    %v1283 = vmul.f32 %v1261, 0.2
    %v1284 = vmul.f32 %v1264, 0.2
    %v1285 = vmul.f32 %v1266, 0.2
    %v1286 = vmul.f32 %v1269, 0.2
    %v1287 = vmul.f32 %v1271, 0.2
    %v1288 = vmul.f32 %v1274, 0.2
    %v1289 = vmul.f32 %v1276, 0.2
    %v1290 = vmax.f32 %v1249, %v1278
    %v1291 = vmax.f32 %v1251, %v1279
    %v1292 = vmax.f32 %v1254, %v1280
    %v1293 = vmax.f32 %v1256, %v1281
    %v1294 = vmax.f32 %v1259, %v1282
    %v1295 = vmax.f32 %v1261, %v1283
    %v1296 = vmax.f32 %v1264, %v1284
    %v1297 = vmax.f32 %v1266, %v1285
    %v1298 = vmax.f32 %v1269, %v1286
    %v1299 = vmax.f32 %v1271, %v1287
    %v1300 = vmax.f32 %v1274, %v1288
    %v1301 = vmax.f32 %v1276, %v1289
    %v1302 = vmul.f32 %v1290, %v75
    %v1303 = vmul.f32 %v1291, %v75
    %v1304 = vmul.f32 %v1292, %v75
    %v1305 = vmul.f32 %v1293, %v75
    %v1306 = vmul.f32 %v1294, %v75
    %v1307 = vmul.f32 %v1295, %v75
    %v1308 = vmul.f32 %v1296, %v75
    %v1309 = vmul.f32 %v1297, %v75
    %v1310 = vmul.f32 %v1298, %v75
    %v1311 = vmul.f32 %v1299, %v75
    %v1312 = vmul.f32 %v1300, %v75
    %v1313 = vmul.f32 %v1301, %v75
    %1314 = vadd.xlane.f32.xlu0 %v1302
    %v1315 = vpop.xlane.xlu0 %1314
    %1316 = vadd.xlane.f32.xlu0 %v1303
    %v1317 = vpop.xlane.xlu0 %1316
    %1318 = vadd.xlane.f32.xlu0 %v1304
    %v1319 = vpop.xlane.xlu0 %1318
    %1320 = vadd.xlane.f32.xlu0 %v1305
    %v1321 = vpop.xlane.xlu0 %1320
    %1322 = vadd.xlane.f32.xlu0 %v1306
    %v1323 = vpop.xlane.xlu0 %1322
    %1324 = vadd.xlane.f32.xlu0 %v1307
    %v1325 = vpop.xlane.xlu0 %1324
    %1326 = vadd.xlane.f32.xlu0 %v1308
    %v1327 = vpop.xlane.xlu0 %1326
    %1328 = vadd.xlane.f32.xlu0 %v1309
    %v1329 = vpop.xlane.xlu0 %1328
    %1330 = vadd.xlane.f32.xlu0 %v1310
    %v1331 = vpop.xlane.xlu0 %1330
    %1332 = vadd.xlane.f32.xlu0 %v1311
    %v1333 = vpop.xlane.xlu0 %1332
    %1334 = vadd.xlane.f32.xlu0 %v1312
    %v1335 = vpop.xlane.xlu0 %1334
    %1336 = vadd.xlane.f32.xlu0 %v1313
    %v1337 = vpop.xlane.xlu0 %1336
    %v1350 = vlaneseq
    %v1351 = vand.u32 %v1350, 127
    %v1352 = vperm.slane %v1315, %v1351
    %v1353 = vadd.s32 %v1351, 4294967288
    %v1354 = vperm.slane %v1317, %v1353
    %vm1355 = vcmask 130112
    %v1356 = vsel %vm1355, %v1354, %v1352
    %v1357 = vadd.s32 %v1351, 4294967280
    %v1358 = vperm.slane %v1319, %v1357
    %vm1359 = vcmask 195712
    %v1360 = vsel %vm1359, %v1358, %v1356
    %v1361 = vadd.s32 %v1351, 4294967272
    %v1362 = vperm.slane %v1321, %v1361
    %vm1363 = vcmask 261312
    %v1364 = vsel %vm1363, %v1362, %v1360
    %v1365 = vadd.s32 %v1351, 4294967264
    %v1366 = vperm.slane %v1323, %v1365
    %vm1367 = vcmask 326912
    %v1368 = vsel %vm1367, %v1366, %v1364
    %v1369 = vadd.s32 %v1351, 4294967256
    %v1370 = vperm.slane %v1325, %v1369
    %vm1371 = vcmask 392512
    %v1372 = vsel %vm1371, %v1370, %v1368
    %v1373 = vperm.slane %v1327, %v1351
    %v1374 = vperm.slane %v1329, %v1353
    %v1375 = vsel %vm1355, %v1374, %v1373
    %v1376 = vperm.slane %v1331, %v1357
    %v1377 = vsel %vm1359, %v1376, %v1375
    %v1378 = vperm.slane %v1333, %v1361
    %v1379 = vsel %vm1363, %v1378, %v1377
    %v1380 = vperm.slane %v1335, %v1365
    %v1381 = vsel %vm1367, %v1380, %v1379
    %v1382 = vperm.slane %v1337, %v1369
    %v1383 = vsel %vm1371, %v1382, %v1381
    %vm1384 = vcmask 1041409
    %v1385 = vsel %vm1384, %v1383, %v1372
    %vm1386 = vcmask 392192
    %v1387 = vsel %vm1386, %v1385, 0
    %1389 = vmatpush.msra.mxu0 0.0
    %1390 = vmatpush.msra.mxu0 0.0
    %1391 = vmatpush.msra.mxu0 0.0
    %1392 = vmatpush.msra.mxu0 0.0
    %1393 = vmatpush.msra.mxu0 0.0
    %1394 = vmatpush.msra.mxu0 0.0
    %1395 = vmatpush.msra.mxu0 0.0
    %1396 = vmatpush.msra.mxu0 0.0
    %1397 = vmatpush.msra.mxu0 0.0
    %1398 = vmatpush.msra.mxu0 0.0
    %1399 = vmatpush.msra.mxu0 %v82
    %1400 = vmatpush.msra.mxu0 %v81
    %1401 = vmatpush.msra.mxu0 %v80
    %1402 = vmatpush.msra.mxu0 %v79
    %1403 = vmatpush.msra.mxu0 %v78
    %1404 = vmatpush.msra.mxu0 %v77
    %1405 = vmatmul.f32.gmra.mxu0 %v1387
    %v1406 = vpop.f32.mrf.mxu0
    %v1407 = vadd.f32 %v76, %v1406
    %1408 = vdwg.mxu0
    %1409 = vst [vmem:[#allocation2] sm:$0x3] %v1407
    // Predicated region
    $region18: #{gan_discriminator_forward.1} parent=1 // pred_check
      _
    $region19: #{gan_discriminator_forward.1} parent=1 // pred_check_branch
      %1411 = sbr.rel (0) target = $region21
    $region20: #{gan_discriminator_forward.1} parent=1 // pred_region
      %1413 = vsyncadd [#allocation3], 0
      %s1415 = sshll.u32 [#allocation2], 4
      %s1416 = int_to_ptr.vmem [resolvable:$true] %s1415
      %s1417 = sshll.u32 %s4, 4
      %s1418 = int_to_ptr.hbm [resolvable:$true] %s1417
      %1420 = dma.vmem_to_hbm [thread:$0]  %s1416, 32, %s1418, [#allocation3]
    $region21: #{gan_discriminator_forward.1} parent=1 // pred_fallthru
      _
    // Predicated region
    $region22: #{gan_discriminator_forward.1} parent=1 // pred_check
      _
    $region23: #{gan_discriminator_forward.1} parent=1 // pred_check_branch
      %1422 = sbr.rel (0) target = $region25
    $region24: #{gan_discriminator_forward.1} parent=1 // pred_region
      %1424 = dma.done [#allocation3], 32
    $region25: #{gan_discriminator_forward.1} parent=1 // pred_fallthru
      _
    %1425 = vsyncpa [#allocation3], 1

</llo_original>
